<compile_context>
chip_gen: v7x
topology: tpu7x:2x2x1
jax: 0.10.0
libtpu: 0.0.40
codegen_flags: <defaults>
</compile_context>

<pallas_src>
import jax
import jax.numpy as jnp
from jax.experimental import pallas as pl
from jax.experimental.pallas import tpu as pltpu


def _one_kernel(x_ref, o_ref):
    # one(inp1, inp2) = inp1 + inp2 + 1 with inp1 == inp2 == input
    x = x_ref[...]
    o_ref[...] = x + x + jnp.asarray(1, dtype=x.dtype)


_LANE = 128
# Sublane packing per element size (f32/ints=8, bf16/f16=16, int8/fp8=32 rows).
_SUBLANE_BY_ITEMSIZE = {8: 8, 4: 8, 2: 16, 1: 32}
# 8 MiB blocks -> (in + out) x double-buffer = 32 MiB live VMEM.
_MAX_BLOCK_BYTES = 8 * 1024 * 1024
# Above this total size, force >= 4 blocks so both v7x TensorCores get work.
_MIN_SPLIT_BYTES = 2 * 1024 * 1024
# Explicit scoped-VMEM budget: safely above the 32 MiB live working set,
# below v7x's 64 MiB physical per-TC VMEM.
_VMEM_LIMIT_BYTES = 48 * 1024 * 1024


def _reference(x):
    return x + x + jnp.asarray(1, dtype=x.dtype)


def _pick_block_rows(rows, cols, itemsize, sublane, total_bytes):
    if rows <= sublane:
        # Full-extent row dim is always a legal block shape.
        return rows
    bytes_per_row = cols * itemsize
    # Cap by VMEM budget.
    max_rows = max(sublane, _MAX_BLOCK_BYTES // bytes_per_row)
    # Guarantee >= 4 balanced blocks on mid/large tensors (2-TC split on v7x).
    if total_bytes >= _MIN_SPLIT_BYTES:
        max_rows = min(max_rows, max(sublane, pl.cdiv(rows, 4)))
    block_rows = min(rows, max_rows)
    # Sublane-align.
    block_rows = max(sublane, (block_rows // sublane) * sublane)
    # Prefer a sublane-multiple divisor of rows so the last block is full-size.
    if rows % block_rows != 0:
        cand = block_rows
        while cand >= sublane:
            if rows % cand == 0:
                return cand
            cand -= sublane
    return block_rows


def uses_interface_forward(x, *, min_pallas_bytes=2 << 20, alias_input=False):
    """Pallas implementation of UsesInterface.forward: returns x + x + 1."""
    n = x.size
    itemsize = jnp.dtype(x.dtype).itemsize

    # Small tensors: pallas_call dispatch overhead dwarfs the work; XLA fuses 2*x+1.
    if n == 0 or n * itemsize < min_pallas_bytes:
        return _reference(x)

    # Pick the widest lane-dense column width that evenly divides the flat size.
    cols = None
    for c in (8192, 4096, 2048, 1024, 512, 256, 128):
        if n % c == 0:
            cols = c
            break
    if cols is None:
        # Total size not a multiple of 128: padding would add a full extra
        # HBM round-trip for a mem-bound op; plain fused JAX is faster.
        return _reference(x)

    rows = n // cols
    x2d = x.reshape(rows, cols)

    sublane = _SUBLANE_BY_ITEMSIZE.get(itemsize, 8)
    block_rows = _pick_block_rows(rows, cols, itemsize, sublane, n * itemsize)
    grid = (pl.cdiv(rows, block_rows),)

    out2d = pl.pallas_call(
        _one_kernel,
        out_shape=jax.ShapeDtypeStruct((rows, cols), x.dtype),
        grid=grid,
        in_specs=[pl.BlockSpec((block_rows, cols), lambda i: (i, 0))],
        out_specs=pl.BlockSpec((block_rows, cols), lambda i: (i, 0)),
        compiler_params=pltpu.CompilerParams(
            dimension_semantics=("parallel",),
            vmem_limit_bytes=_VMEM_LIMIT_BYTES,
        ),
        # Optional in-place path for memory-tight callers (input must be donated
        # by the enclosing jit for this to avoid a defensive copy).
        input_output_aliases={0: 0} if alias_input else {},
    )(x2d)

    return out2d.reshape(x.shape)


if __name__ == "__main__":
    key = jax.random.PRNGKey(0)
    k0, k1 = jax.random.split(key)

    # Small representative input shape (batch=2, channels=4, spatial=16x16).
    # Force the Pallas path (min_pallas_bytes=0) so the kernel itself is exercised.
    x_small = jax.random.normal(k0, (2, 4, 16, 16), dtype=jnp.float32)
    out_small = uses_interface_forward(x_small, min_pallas_bytes=0)
    jax.block_until_ready(out_small)
    exp_small = x_small + x_small + 1.0
    assert out_small.shape == x_small.shape and out_small.dtype == x_small.dtype
    assert jnp.allclose(out_small, exp_small, atol=1e-6, rtol=1e-6)

    # Larger input exercises the multi-block (>= 4) 1-D grid / MiB-scale tiling.
    x_big = jax.random.normal(k1, (1024, 4096), dtype=jnp.float32)
    out_big = uses_interface_forward(x_big)
    jax.block_until_ready(out_big)
    exp_big = x_big + x_big + 1.0
    assert out_big.shape == x_big.shape and out_big.dtype == x_big.dtype
    assert jnp.allclose(out_big, exp_big, atol=1e-6, rtol=1e-6)

    print("KERNEL_OK")
</pallas_src>

<mosaic_0001>
module attributes {stable_mosaic.version = 11 : i64} {
  func.func @_one_kernel(%arg0: i32, %arg1: memref<1x2048xf32, #tpu.memory_space<vmem>>, %arg2: memref<1x2048xf32, #tpu.memory_space<vmem>>) attributes {dimension_semantics = [#tpu.dimension_semantics<parallel>], iteration_bounds = array<i64: 1>, scalar_prefetch = 0 : i64, scratch_operands = 0 : i64, tpu.core_type = #tpu.core_type<tc>, window_params = [{transform_indices = @transform_0, window_bounds = array<i64: 1, 2048>}, {transform_indices = @transform_1, window_bounds = array<i64: 1, 2048>}]} {
    %c0 = arith.constant 0 : index
    %c0_0 = arith.constant 0 : index
    %0 = vector.load %arg1[%c0, %c0_0] : memref<1x2048xf32, #tpu.memory_space<vmem>>, vector<1x2048xf32>
    %1 = arith.addf %0, %0 : vector<1x2048xf32>
    %cst = arith.constant 1.000000e+00 : f32
    %2 = vector.broadcast %cst : f32 to vector<1x2048xf32>
    %3 = arith.addf %1, %2 : vector<1x2048xf32>
    %c0_1 = arith.constant 0 : index
    %c0_2 = arith.constant 0 : index
    %4 = vector.load %arg2[%c0_1, %c0_2] : memref<1x2048xf32, #tpu.memory_space<vmem>>, vector<1x2048xf32>
    tpu.vector_store %arg2[%c0_1, %c0_2], %3 {strides = array<i32>} : memref<1x2048xf32, #tpu.memory_space<vmem>>, vector<1x2048xf32>,
    return
  }
  func.func @transform_0(%arg0: i32) -> (i32, i32) {
    %c0_i32 = arith.constant 0 : i32
    %c0_i32_0 = arith.constant 0 : i32
    return %arg0, %c0_i32 : i32, i32
  }
  func.func @transform_1(%arg0: i32) -> (i32, i32) {
    %c0_i32 = arith.constant 0 : i32
    %c0_i32_0 = arith.constant 0 : i32
    return %arg0, %c0_i32 : i32, i32
  }
}

</mosaic_0001>

<llo_original>
// kernel: tpu_custom_call.1
$region0: #{tpu_custom_call.1}
  #allocation0 [shape = 'u32[]', space=smem, size = 0x4, offset = 0x4, fixed_abs, tag = 'smem constant byte address 0x4 - core index']
  #allocation1 [shape = 'u32[144,128]{1,0:T(1,128)}', space=vmem, size = 0x12000, scoped, tag = 'internal scratch']
  %s0 = inlined_call_operand.hbm [shape: f32[1,2048], index: 0, kind: input, shape index: {}]
  %s1 = inlined_call_operand.hbm [shape: f32[1,2048], index: 1, kind: output, shape index: {}]
  %s2 = sld [smem:[#allocation0]]
  $region18: #{tpu_custom_call.1} parent=0
    _
  %s4 = ssub.s32 1, %s2
  %s5 = scalar_select 0, %s4, %s2
  $region1: #{tpu_custom_call.1} parent=0
    #allocation2 [shape = 'u8[8192]{0}', space=vmem, size = 0x2000, scoped, tag = 'input window, operand 0, single buffered']
    #allocation3 [shape = 's32[1]{0}', space=sflag, size = 0x4, scoped, tag = 'scoped memory for tpu_custom_call.1']
    #allocation4 [shape = 's32[1]{0}', space=sflag, size = 0x4, scoped, tag = 'scoped memory for tpu_custom_call.1']
    #allocation5 [shape = 'u8[8192]{0}', space=vmem, size = 0x2000, scoped, tag = 'output window, operand 0, single buffered']
    %6 = vsyncpa [#allocation3], 0
    %7 = vsyncpa [#allocation4], 0
    // Predicated region
    $region2: #{tpu_custom_call.1} parent=1 // pred_check
      _
    $region3: #{tpu_custom_call.1} parent=1 // pred_check_branch
      %9 = sbr.rel (0) target = $region5
    $region4: #{tpu_custom_call.1} parent=1 // pred_region
      %s11 = ssub.s32 256, 256
      %12 = vsyncadd [#allocation3], %s11
      %s14 = sshll.u32 [#allocation2], 4
      %s15 = int_to_ptr.vmem [resolvable:$true] %s14
      %17 = dma.hbm_to_vmem [thread:$0]  %s0, 256, %s15, [#allocation3]
    $region5: #{tpu_custom_call.1} parent=1 // pred_fallthru
      _
    // Predicated region
    $region6: #{tpu_custom_call.1} parent=1 // pred_check
      _
    $region7: #{tpu_custom_call.1} parent=1 // pred_check_branch
      %19 = sbr.rel (0) target = $region9
    $region8: #{tpu_custom_call.1} parent=1 // pred_region
      %20 = dma.done [#allocation3], 256
    $region9: #{tpu_custom_call.1} parent=1 // pred_fallthru
      _
    %v21 = vld [vmem:[#allocation2] sm:$0xff]
    %v22 = vld [vmem:[#allocation2 + $0x8] sm:$0xff]
    %v23 = vadd.f32 %v21, %v21
    %v24 = vadd.f32 %v22, %v22
    %v25 = vadd.f32 %v23, 1.0
    %v26 = vadd.f32 %v24, 1.0
    %27 = vst [vmem:[#allocation5] sm:$0xff] %v25
    %28 = vst [vmem:[#allocation5 + $0x8] sm:$0xff] %v26
    // Predicated region
    $region10: #{tpu_custom_call.1} parent=1 // pred_check
      _
    $region11: #{tpu_custom_call.1} parent=1 // pred_check_branch
      %30 = sbr.rel (0) target = $region13
    $region12: #{tpu_custom_call.1} parent=1 // pred_region
      %s32 = ssub.s32 256, 256
      %33 = vsyncadd [#allocation4], %s32
      %s35 = sshll.u32 [#allocation5], 4
      %s36 = int_to_ptr.vmem [resolvable:$true] %s35
      %38 = dma.vmem_to_hbm [thread:$0]  %s36, 256, %s1, [#allocation4]
    $region13: #{tpu_custom_call.1} parent=1 // pred_fallthru
      _
    // Predicated region
    $region14: #{tpu_custom_call.1} parent=1 // pred_check
      _
    $region15: #{tpu_custom_call.1} parent=1 // pred_check_branch
      %40 = sbr.rel (0) target = $region17
    $region16: #{tpu_custom_call.1} parent=1 // pred_region
      %41 = dma.done [#allocation4], 256
    $region17: #{tpu_custom_call.1} parent=1 // pred_fallthru
      _
    %42 = vsyncpa [#allocation3], 1
    %43 = vsyncpa [#allocation4], 1

</llo_original>
